<compile_context>
chip_gen: v5e
topology: v5e:2x2
jax: 0.10.0
libtpu: 0.0.40
codegen_flags: <defaults>
</compile_context>

<pallas_src>
import functools

import jax
import jax.numpy as jnp
from jax.experimental import pallas as pl
from jax.experimental.pallas import tpu as pltpu

SUBLANE = 8          # f32 sublane count (second-to-last dim granularity)
MIN_TILE_SPLIT = 256 # don't split into tiles shorter than this many rows


def _round_up(n, m):
    return ((n + m - 1) // m) * m


def _supports_bf16_elementwise():
    """True on chips with a bf16 VPU/EUP (v6e, v7x); False on v5e and older."""
    try:
        kind = jax.devices()[0].device_kind.lower()
    except Exception:
        return False
    return not any(t in kind for t in ("v2", "v3", "v4", "v5"))


def encoder_kernel(x_ref,
                   w1_ref, b1_ref,
                   w2_ref, b2_ref,
                   w3_ref, b3_ref,
                   w4_ref, b4_ref,
                   w5_ref, b5_ref,
                   o_ref, *, act_dtype):
    """5-layer MLP on one (tile_b, data_dim) batch tile.

    Matmuls run in the weights' storage dtype (bf16 fast path) with f32
    accumulation on the MXU; bias adds / activations run in `act_dtype`
    (bf16 on v6e/v7x, f32 on v5e and for the f32 correctness path).
    """
    mm_dtype = w1_ref.dtype
    h = x_ref[...].astype(mm_dtype)          # single cast straight to MXU dtype

    def layer(h, w_ref, b_ref):
        acc = jnp.dot(h.astype(mm_dtype), w_ref[...],
                      preferred_element_type=jnp.float32)   # f32 accumulation
        return acc.astype(act_dtype) + b_ref[...].astype(act_dtype)

    def lrelu(x):
        # max(x, 0.02*x) == LeakyReLU(0.02) for slope in (0, 1); 2 VALU ops.
        return jnp.maximum(x, jnp.asarray(0.02, x.dtype) * x)

    h = lrelu(layer(h, w1_ref, b1_ref))
    h = lrelu(layer(h, w2_ref, b2_ref))
    h = lrelu(layer(h, w3_ref, b3_ref))
    h = lrelu(layer(h, w4_ref, b4_ref))
    h = jnp.tanh(layer(h, w5_ref, b5_ref))
    o_ref[...] = h.astype(o_ref.dtype)


def init_encoder_params(key, data_dim, hidden_dim, dtype=jnp.float32):
    """Deterministic PyTorch-style (uniform +-1/sqrt(fan_in)) init.

    Weights stored as [in_features, out_features]; biases as [1, out_features].
    """
    dims = [data_dim, 2 ** 6, 2 ** 8, 2 ** 8, 2 ** 6, hidden_dim]
    params = []
    for i in range(5):
        fan_in, fan_out = dims[i], dims[i + 1]
        key, kw, kb = jax.random.split(key, 3)
        bound = 1.0 / jnp.sqrt(jnp.float32(fan_in))
        w = jax.random.uniform(kw, (fan_in, fan_out), dtype, -bound, bound)
        b = jax.random.uniform(kb, (1, fan_out), dtype, -bound, bound)
        params.append((w, b))
    return params


def prepare_encoder_params(params, matmul_dtype=jnp.bfloat16):
    """One-time prep: weights cast to the MXU operand dtype, biases to f32.

    Returns a flat tuple (w1, b1, ..., w5, b5).  No per-call pad/cast work
    remains in the forward pass.
    """
    flat = []
    for w, b in params:
        flat.append(jnp.asarray(w, matmul_dtype))
        flat.append(jnp.asarray(b, jnp.float32).reshape(1, -1))
    return tuple(flat)


def _x_block_spec(tile_b, data_dim, buffered):
    idx = lambda i: (i, 0)
    if buffered:
        try:
            # 3-deep buffering on the only streamed input hides DMA latency.
            return pl.BlockSpec((tile_b, data_dim), idx,
                                pipeline_mode=pl.Buffered(3))
        except TypeError:   # older BlockSpec without pipeline_mode kwarg
            pass
    return pl.BlockSpec((tile_b, data_dim), idx)


@functools.partial(jax.jit, static_argnames=("batch_tile", "act_dtype"))
def _encoder_forward_impl(x, flat, batch_tile, act_dtype):
    B, data_dim = x.shape
    hidden_dim = flat[-2].shape[1]

    # --- batch tiling ---------------------------------------------------------
    b8 = _round_up(B, SUBLANE)
    tile_b = min(batch_tile, b8)
    # For large batches, force >= 2 grid steps so "parallel" semantics can use
    # both TensorCores on v7x; never shrink tiles below MIN_TILE_SPLIT rows.
    if tile_b >= b8 and b8 >= 2 * MIN_TILE_SPLIT:
        tile_b = _round_up(-(-b8 // 2), SUBLANE)
    B_pad = _round_up(B, tile_b)
    num_steps = B_pad // tile_b

    x_p = x if B_pad == B else jnp.pad(x, ((0, B_pad - B), (0, 0)))

    # --- specs: x streamed, weights/biases resident (constant block index) ----
    in_specs = [_x_block_spec(tile_b, data_dim, buffered=num_steps >= 3)]
    in_specs += [pl.BlockSpec(a.shape, lambda i: (0, 0)) for a in flat]
    out_spec = pl.BlockSpec((tile_b, hidden_dim), lambda i: (i, 0))

    out = pl.pallas_call(
        functools.partial(encoder_kernel, act_dtype=act_dtype),
        out_shape=jax.ShapeDtypeStruct((B_pad, hidden_dim), x.dtype),
        grid_spec=pltpu.PrefetchScalarGridSpec(
            num_scalar_prefetch=0,
            grid=(num_steps,),
            in_specs=in_specs,
            out_specs=out_spec,
        ),
        compiler_params=pltpu.CompilerParams(
            dimension_semantics=("parallel",)),
    )(x_p, *flat)

    return out if B_pad == B else out[:B]


def encoder_forward(x, flat_params, batch_tile=1024, act_dtype=None):
    """Forward pass. `flat_params` comes from prepare_encoder_params()."""
    mm_dtype = jnp.dtype(flat_params[0].dtype)
    if act_dtype is None:
        if mm_dtype == jnp.bfloat16 and _supports_bf16_elementwise():
            act_dtype = jnp.bfloat16      # v6e / v7x: bf16 VPU elementwise
        else:
            act_dtype = jnp.float32       # v5e (no bf16 VPU) or f32 path
    return _encoder_forward_impl(x, flat_params,
                                 batch_tile=batch_tile, act_dtype=act_dtype)


def encoder_reference(x, params):
    h = x.astype(jnp.float32)
    for idx, (w, b) in enumerate(params):
        h = h @ w + b
        h = jnp.where(h >= 0, h, 0.02 * h) if idx < len(params) - 1 else jnp.tanh(h)
    return h.astype(x.dtype)


if __name__ == "__main__":
    data_dim = 32
    hidden_dim = 32

    key = jax.random.PRNGKey(0)
    key, kx = jax.random.split(key)
    params = init_encoder_params(key, data_dim, hidden_dim)

    flat_bf16 = prepare_encoder_params(params, matmul_dtype=jnp.bfloat16)
    flat_f32 = prepare_encoder_params(params, matmul_dtype=jnp.float32)

    # --- tiny batch: single grid step -----------------------------------------
    x_small = jax.random.normal(kx, (16, data_dim), jnp.float32)
    ref_small = encoder_reference(x_small, params)

    out_f32 = jax.block_until_ready(encoder_forward(x_small, flat_f32))
    assert out_f32.shape == (16, hidden_dim)
    assert jnp.allclose(out_f32, ref_small, atol=1e-5, rtol=1e-5), \
        "f32 path mismatch vs reference"

    out_bf16 = jax.block_until_ready(encoder_forward(x_small, flat_bf16))
    assert out_bf16.shape == (16, hidden_dim)
    assert jnp.allclose(out_bf16, ref_small, atol=5e-2, rtol=5e-2), \
        "bf16 path mismatch vs reference"

    # --- larger, non-multiple batch: 2-step grid via the v7x split path -------
    key, kx2 = jax.random.split(key)
    x_big = jax.random.normal(kx2, (650, data_dim), jnp.float32)
    ref_big = encoder_reference(x_big, params)
    out_big = jax.block_until_ready(encoder_forward(x_big, flat_bf16))
    assert out_big.shape == (650, hidden_dim)
    assert jnp.allclose(out_big, ref_big, atol=5e-2, rtol=5e-2), \
        "2-step bf16 path mismatch vs reference"

    # --- >=3-step grid: exercises batch padding + Buffered(3) input spec ------
    out_big3 = jax.block_until_ready(
        encoder_forward(x_big, flat_bf16, batch_tile=256))
    assert out_big3.shape == (650, hidden_dim)
    assert jnp.allclose(out_big3, ref_big, atol=5e-2, rtol=5e-2), \
        "3-step bf16 path mismatch vs reference"

    print("KERNEL_OK")
</pallas_src>

<mosaic_0001>
module attributes {stable_mosaic.version = 11 : i64} {
  func.func @encoder_kernel(%arg0: i32, %arg1: memref<16x32xf32, #tpu.memory_space<vmem>>, %arg2: memref<32x64xf32, #tpu.memory_space<vmem>>, %arg3: memref<1x64xf32, #tpu.memory_space<vmem>>, %arg4: memref<64x256xf32, #tpu.memory_space<vmem>>, %arg5: memref<1x256xf32, #tpu.memory_space<vmem>>, %arg6: memref<256x256xf32, #tpu.memory_space<vmem>>, %arg7: memref<1x256xf32, #tpu.memory_space<vmem>>, %arg8: memref<256x64xf32, #tpu.memory_space<vmem>>, %arg9: memref<1x64xf32, #tpu.memory_space<vmem>>, %arg10: memref<64x32xf32, #tpu.memory_space<vmem>>, %arg11: memref<1x32xf32, #tpu.memory_space<vmem>>, %arg12: memref<16x32xf32, #tpu.memory_space<vmem>>) attributes {dimension_semantics = [#tpu.dimension_semantics<parallel>], iteration_bounds = array<i64: 1>, scalar_prefetch = 0 : i64, scratch_operands = 0 : i64, tpu.core_type = #tpu.core_type<tc>, window_params = [{transform_indices = @transform_0, window_bounds = array<i64: 16, 32>}, {pipeline_mode = #tpu.pipeline_mode<synchronous>, transform_indices = @transform_1, window_bounds = array<i64: 32, 64>}, {pipeline_mode = #tpu.pipeline_mode<synchronous>, transform_indices = @transform_2, window_bounds = array<i64: 1, 64>}, {pipeline_mode = #tpu.pipeline_mode<synchronous>, transform_indices = @transform_3, window_bounds = array<i64: 64, 256>}, {pipeline_mode = #tpu.pipeline_mode<synchronous>, transform_indices = @transform_4, window_bounds = array<i64: 1, 256>}, {pipeline_mode = #tpu.pipeline_mode<synchronous>, transform_indices = @transform_5, window_bounds = array<i64: 256, 256>}, {pipeline_mode = #tpu.pipeline_mode<synchronous>, transform_indices = @transform_6, window_bounds = array<i64: 1, 256>}, {pipeline_mode = #tpu.pipeline_mode<synchronous>, transform_indices = @transform_7, window_bounds = array<i64: 256, 64>}, {pipeline_mode = #tpu.pipeline_mode<synchronous>, transform_indices = @transform_8, window_bounds = array<i64: 1, 64>}, {pipeline_mode = #tpu.pipeline_mode<synchronous>, transform_indices = @transform_9, window_bounds = array<i64: 64, 32>}, {pipeline_mode = #tpu.pipeline_mode<synchronous>, transform_indices = @transform_10, window_bounds = array<i64: 1, 32>}, {transform_indices = @transform_11, window_bounds = array<i64: 16, 32>}]} {
    %c0 = arith.constant 0 : index
    %c0_0 = arith.constant 0 : index
    %0 = vector.load %arg1[%c0, %c0_0] : memref<16x32xf32, #tpu.memory_space<vmem>>, vector<16x32xf32>
    %c0_1 = arith.constant 0 : index
    %c0_2 = arith.constant 0 : index
    %1 = vector.load %arg2[%c0_1, %c0_2] : memref<32x64xf32, #tpu.memory_space<vmem>>, vector<32x64xf32>
    %cst = arith.constant dense<0.000000e+00> : vector<16x64xf32>
    %2 = tpu.matmul %0, %1, %cst {dimension_numbers = #tpu.dot_dimension_numbers<[1], [0], [0], [1], [0, 0, 1, 1], [], []>} : vector<16x32xf32>, vector<32x64xf32>, vector<16x64xf32> -> vector<16x64xf32>
    %c0_3 = arith.constant 0 : index
    %c0_4 = arith.constant 0 : index
    %3 = vector.load %arg3[%c0_3, %c0_4] : memref<1x64xf32, #tpu.memory_space<vmem>>, vector<1x64xf32>
    %4 = vector.broadcast %3 : vector<1x64xf32> to vector<16x64xf32>
    %5 = arith.addf %2, %4 : vector<16x64xf32>
    %cst_5 = arith.constant 2.000000e-02 : f32
    %6 = vector.broadcast %cst_5 : f32 to vector<16x64xf32>
    %7 = arith.mulf %6, %5 : vector<16x64xf32>
    %8 = arith.maximumf %5, %7 : vector<16x64xf32>
    %c0_6 = arith.constant 0 : index
    %c0_7 = arith.constant 0 : index
    %9 = vector.load %arg4[%c0_6, %c0_7] : memref<64x256xf32, #tpu.memory_space<vmem>>, vector<64x256xf32>
    %cst_8 = arith.constant dense<0.000000e+00> : vector<16x256xf32>
    %10 = tpu.matmul %8, %9, %cst_8 {dimension_numbers = #tpu.dot_dimension_numbers<[1], [0], [0], [1], [0, 0, 1, 1], [], []>} : vector<16x64xf32>, vector<64x256xf32>, vector<16x256xf32> -> vector<16x256xf32>
    %c0_9 = arith.constant 0 : index
    %c0_10 = arith.constant 0 : index
    %11 = vector.load %arg5[%c0_9, %c0_10] : memref<1x256xf32, #tpu.memory_space<vmem>>, vector<1x256xf32>
    %12 = vector.broadcast %11 : vector<1x256xf32> to vector<16x256xf32>
    %13 = arith.addf %10, %12 : vector<16x256xf32>
    %cst_11 = arith.constant 2.000000e-02 : f32
    %14 = vector.broadcast %cst_11 : f32 to vector<16x256xf32>
    %15 = arith.mulf %14, %13 : vector<16x256xf32>
    %16 = arith.maximumf %13, %15 : vector<16x256xf32>
    %c0_12 = arith.constant 0 : index
    %c0_13 = arith.constant 0 : index
    %17 = vector.load %arg6[%c0_12, %c0_13] : memref<256x256xf32, #tpu.memory_space<vmem>>, vector<256x256xf32>
    %cst_14 = arith.constant dense<0.000000e+00> : vector<16x256xf32>
    %18 = tpu.matmul %16, %17, %cst_14 {dimension_numbers = #tpu.dot_dimension_numbers<[1], [0], [0], [1], [0, 0, 1, 1], [], []>} : vector<16x256xf32>, vector<256x256xf32>, vector<16x256xf32> -> vector<16x256xf32>
    %c0_15 = arith.constant 0 : index
    %c0_16 = arith.constant 0 : index
    %19 = vector.load %arg7[%c0_15, %c0_16] : memref<1x256xf32, #tpu.memory_space<vmem>>, vector<1x256xf32>
    %20 = vector.broadcast %19 : vector<1x256xf32> to vector<16x256xf32>
    %21 = arith.addf %18, %20 : vector<16x256xf32>
    %cst_17 = arith.constant 2.000000e-02 : f32
    %22 = vector.broadcast %cst_17 : f32 to vector<16x256xf32>
    %23 = arith.mulf %22, %21 : vector<16x256xf32>
    %24 = arith.maximumf %21, %23 : vector<16x256xf32>
    %c0_18 = arith.constant 0 : index
    %c0_19 = arith.constant 0 : index
    %25 = vector.load %arg8[%c0_18, %c0_19] : memref<256x64xf32, #tpu.memory_space<vmem>>, vector<256x64xf32>
    %cst_20 = arith.constant dense<0.000000e+00> : vector<16x64xf32>
    %26 = tpu.matmul %24, %25, %cst_20 {dimension_numbers = #tpu.dot_dimension_numbers<[1], [0], [0], [1], [0, 0, 1, 1], [], []>} : vector<16x256xf32>, vector<256x64xf32>, vector<16x64xf32> -> vector<16x64xf32>
    %c0_21 = arith.constant 0 : index
    %c0_22 = arith.constant 0 : index
    %27 = vector.load %arg9[%c0_21, %c0_22] : memref<1x64xf32, #tpu.memory_space<vmem>>, vector<1x64xf32>
    %28 = vector.broadcast %27 : vector<1x64xf32> to vector<16x64xf32>
    %29 = arith.addf %26, %28 : vector<16x64xf32>
    %cst_23 = arith.constant 2.000000e-02 : f32
    %30 = vector.broadcast %cst_23 : f32 to vector<16x64xf32>
    %31 = arith.mulf %30, %29 : vector<16x64xf32>
    %32 = arith.maximumf %29, %31 : vector<16x64xf32>
    %c0_24 = arith.constant 0 : index
    %c0_25 = arith.constant 0 : index
    %33 = vector.load %arg10[%c0_24, %c0_25] : memref<64x32xf32, #tpu.memory_space<vmem>>, vector<64x32xf32>
    %cst_26 = arith.constant dense<0.000000e+00> : vector<16x32xf32>
    %34 = tpu.matmul %32, %33, %cst_26 {dimension_numbers = #tpu.dot_dimension_numbers<[1], [0], [0], [1], [0, 0, 1, 1], [], []>} : vector<16x64xf32>, vector<64x32xf32>, vector<16x32xf32> -> vector<16x32xf32>
    %c0_27 = arith.constant 0 : index
    %c0_28 = arith.constant 0 : index
    %35 = vector.load %arg11[%c0_27, %c0_28] : memref<1x32xf32, #tpu.memory_space<vmem>>, vector<1x32xf32>
    %36 = vector.broadcast %35 : vector<1x32xf32> to vector<16x32xf32>
    %37 = arith.addf %34, %36 : vector<16x32xf32>
    %38 = math.tanh %37 : vector<16x32xf32>
    %c0_29 = arith.constant 0 : index
    %c0_30 = arith.constant 0 : index
    %39 = vector.load %arg12[%c0_29, %c0_30] : memref<16x32xf32, #tpu.memory_space<vmem>>, vector<16x32xf32>
    tpu.vector_store %arg12[%c0_29, %c0_30], %38 {strides = array<i32>} : memref<16x32xf32, #tpu.memory_space<vmem>>, vector<16x32xf32>,
    return
  }
  func.func @transform_0(%arg0: i32) -> (i32, i32) {
    %c0_i32 = arith.constant 0 : i32
    %c0_i32_0 = arith.constant 0 : i32
    return %arg0, %c0_i32 : i32, i32
  }
  func.func @transform_1(%arg0: i32) -> (i32, i32) {
    %c0_i32 = arith.constant 0 : i32
    %c0_i32_0 = arith.constant 0 : i32
    %c0_i32_1 = arith.constant 0 : i32
    return %c0_i32, %c0_i32_0 : i32, i32
  }
  func.func @transform_2(%arg0: i32) -> (i32, i32) {
    %c0_i32 = arith.constant 0 : i32
    %c0_i32_0 = arith.constant 0 : i32
    %c0_i32_1 = arith.constant 0 : i32
    return %c0_i32, %c0_i32_0 : i32, i32
  }
  func.func @transform_3(%arg0: i32) -> (i32, i32) {
    %c0_i32 = arith.constant 0 : i32
    %c0_i32_0 = arith.constant 0 : i32
    %c0_i32_1 = arith.constant 0 : i32
    return %c0_i32, %c0_i32_0 : i32, i32
  }
  func.func @transform_4(%arg0: i32) -> (i32, i32) {
    %c0_i32 = arith.constant 0 : i32
    %c0_i32_0 = arith.constant 0 : i32
    %c0_i32_1 = arith.constant 0 : i32
    return %c0_i32, %c0_i32_0 : i32, i32
  }
  func.func @transform_5(%arg0: i32) -> (i32, i32) {
    %c0_i32 = arith.constant 0 : i32
    %c0_i32_0 = arith.constant 0 : i32
    %c0_i32_1 = arith.constant 0 : i32
    return %c0_i32, %c0_i32_0 : i32, i32
  }
  func.func @transform_6(%arg0: i32) -> (i32, i32) {
    %c0_i32 = arith.constant 0 : i32
    %c0_i32_0 = arith.constant 0 : i32
    %c0_i32_1 = arith.constant 0 : i32
    return %c0_i32, %c0_i32_0 : i32, i32
  }
  func.func @transform_7(%arg0: i32) -> (i32, i32) {
    %c0_i32 = arith.constant 0 : i32
    %c0_i32_0 = arith.constant 0 : i32
    %c0_i32_1 = arith.constant 0 : i32
    return %c0_i32, %c0_i32_0 : i32, i32
  }
  func.func @transform_8(%arg0: i32) -> (i32, i32) {
    %c0_i32 = arith.constant 0 : i32
    %c0_i32_0 = arith.constant 0 : i32
    %c0_i32_1 = arith.constant 0 : i32
    return %c0_i32, %c0_i32_0 : i32, i32
  }
  func.func @transform_9(%arg0: i32) -> (i32, i32) {
    %c0_i32 = arith.constant 0 : i32
    %c0_i32_0 = arith.constant 0 : i32
    %c0_i32_1 = arith.constant 0 : i32
    return %c0_i32, %c0_i32_0 : i32, i32
  }
  func.func @transform_10(%arg0: i32) -> (i32, i32) {
    %c0_i32 = arith.constant 0 : i32
    %c0_i32_0 = arith.constant 0 : i32
    %c0_i32_1 = arith.constant 0 : i32
    return %c0_i32, %c0_i32_0 : i32, i32
  }
  func.func @transform_11(%arg0: i32) -> (i32, i32) {
    %c0_i32 = arith.constant 0 : i32
    %c0_i32_0 = arith.constant 0 : i32
    return %arg0, %c0_i32 : i32, i32
  }
}

</mosaic_0001>

<llo_original>
// kernel: _encoder_forward_impl.1
$region0: #{_encoder_forward_impl.1}
  #allocation0 [shape = 'u32[]', space=smem, size = 0x4, offset = 0x4, fixed_abs, tag = 'smem constant byte address 0x4 - core index']
  #allocation1 [shape = 'u32[72,128]{1,0:T(1,128)}', space=vmem, size = 0x9000, scoped, tag = 'internal scratch']
  %s0 = inlined_call_operand.vmem [shape: f32[16,32], index: 0, kind: input, shape index: {}]
  %s1 = inlined_call_operand.vmem [shape: f32[32,64], index: 1, kind: input, shape index: {}]
  %s2 = inlined_call_operand.vmem [shape: f32[1,64], index: 2, kind: input, shape index: {}]
  %s3 = inlined_call_operand.vmem [shape: f32[64,256], index: 3, kind: input, shape index: {}]
  %s4 = inlined_call_operand.vmem [shape: f32[1,256], index: 4, kind: input, shape index: {}]
  %s5 = inlined_call_operand.hbm [shape: f32[256,256], index: 5, kind: input, shape index: {}]
  %s6 = inlined_call_operand.vmem [shape: f32[1,256], index: 6, kind: input, shape index: {}]
  %s7 = inlined_call_operand.vmem [shape: f32[256,64], index: 7, kind: input, shape index: {}]
  %s8 = inlined_call_operand.vmem [shape: f32[1,64], index: 8, kind: input, shape index: {}]
  %s9 = inlined_call_operand.vmem [shape: f32[64,32], index: 9, kind: input, shape index: {}]
  %s10 = inlined_call_operand.vmem [shape: f32[1,32], index: 10, kind: input, shape index: {}]
  %s11 = inlined_call_operand.hbm [shape: f32[16,32], index: 11, kind: output, shape index: {}]
  %s12 = sld [smem:[#allocation0]]
  $region58: #{_encoder_forward_impl.1} parent=0
    _
  %s14 = ssub.s32 1, %s12
  %s15 = scalar_select 0, %s14, %s12
  $region1: #{_encoder_forward_impl.1} parent=0
    #allocation2 [shape = 'u8[262144]{0}', space=vmem, size = 0x40000, scoped, tag = 'input window, operand 5, single buffered']
    #allocation3 [shape = 's32[1]{0}', space=sflag, size = 0x4, scoped, tag = 'scoped memory for _encoder_forward_impl.1']
    #allocation4 [shape = 's32[1]{0}', space=sflag, size = 0x4, scoped, tag = 'scoped memory for _encoder_forward_impl.1']
    #allocation5 [shape = 'u8[8192]{0}', space=vmem, size = 0x2000, scoped, tag = 'output window, operand 0, single buffered']
    %16 = vsyncpa [#allocation3], 0
    %17 = vsyncpa [#allocation4], 0
    // Predicated region
    $region2: #{_encoder_forward_impl.1} parent=1 // pred_check
      _
    $region3: #{_encoder_forward_impl.1} parent=1 // pred_check_branch
      %19 = sbr.rel (0) target = $region5
    $region4: #{_encoder_forward_impl.1} parent=1 // pred_region
      _
    $region5: #{_encoder_forward_impl.1} parent=1 // pred_fallthru
      _
    // Predicated region
    $region6: #{_encoder_forward_impl.1} parent=1 // pred_check
      _
    $region7: #{_encoder_forward_impl.1} parent=1 // pred_check_branch
      %21 = sbr.rel (0) target = $region9
    $region8: #{_encoder_forward_impl.1} parent=1 // pred_region
      _
    $region9: #{_encoder_forward_impl.1} parent=1 // pred_fallthru
      _
    // Predicated region
    $region10: #{_encoder_forward_impl.1} parent=1 // pred_check
      _
    $region11: #{_encoder_forward_impl.1} parent=1 // pred_check_branch
      %23 = sbr.rel (0) target = $region13
    $region12: #{_encoder_forward_impl.1} parent=1 // pred_region
      _
    $region13: #{_encoder_forward_impl.1} parent=1 // pred_fallthru
      _
    // Predicated region
    $region14: #{_encoder_forward_impl.1} parent=1 // pred_check
      _
    $region15: #{_encoder_forward_impl.1} parent=1 // pred_check_branch
      %25 = sbr.rel (0) target = $region17
    $region16: #{_encoder_forward_impl.1} parent=1 // pred_region
      _
    $region17: #{_encoder_forward_impl.1} parent=1 // pred_fallthru
      _
    // Predicated region
    $region18: #{_encoder_forward_impl.1} parent=1 // pred_check
      _
    $region19: #{_encoder_forward_impl.1} parent=1 // pred_check_branch
      %27 = sbr.rel (0) target = $region21
    $region20: #{_encoder_forward_impl.1} parent=1 // pred_region
      _
    $region21: #{_encoder_forward_impl.1} parent=1 // pred_fallthru
      _
    // Predicated region
    $region22: #{_encoder_forward_impl.1} parent=1 // pred_check
      _
    $region23: #{_encoder_forward_impl.1} parent=1 // pred_check_branch
      %29 = sbr.rel (0) target = $region25
    $region24: #{_encoder_forward_impl.1} parent=1 // pred_region
      %31 = vsyncadd [#allocation3], 0
      %s32 = sshll.u32 %s5, 4
      %s33 = int_to_ptr.hbm [resolvable:$true] %s32
      %s34 = sshll.u32 [#allocation2], 4
      %s35 = int_to_ptr.vmem [resolvable:$true] %s34
      %40 = dma.hbm_to_vmem [thread:$0]  %s33, 8192, %s35, [#allocation3], 256, 256, 16
    $region25: #{_encoder_forward_impl.1} parent=1 // pred_fallthru
      _
    // Predicated region
    $region26: #{_encoder_forward_impl.1} parent=1 // pred_check
      _
    $region27: #{_encoder_forward_impl.1} parent=1 // pred_check_branch
      %42 = sbr.rel (0) target = $region29
    $region28: #{_encoder_forward_impl.1} parent=1 // pred_region
      _
    $region29: #{_encoder_forward_impl.1} parent=1 // pred_fallthru
      _
    // Predicated region
    $region30: #{_encoder_forward_impl.1} parent=1 // pred_check
      _
    $region31: #{_encoder_forward_impl.1} parent=1 // pred_check_branch
      %44 = sbr.rel (0) target = $region33
    $region32: #{_encoder_forward_impl.1} parent=1 // pred_region
      _
    $region33: #{_encoder_forward_impl.1} parent=1 // pred_fallthru
      _
    // Predicated region
    $region34: #{_encoder_forward_impl.1} parent=1 // pred_check
      _
    $region35: #{_encoder_forward_impl.1} parent=1 // pred_check_branch
      %46 = sbr.rel (0) target = $region37
    $region36: #{_encoder_forward_impl.1} parent=1 // pred_region
      _
    $region37: #{_encoder_forward_impl.1} parent=1 // pred_fallthru
      _
    // Predicated region
    $region38: #{_encoder_forward_impl.1} parent=1 // pred_check
      _
    $region39: #{_encoder_forward_impl.1} parent=1 // pred_check_branch
      %48 = sbr.rel (0) target = $region41
    $region40: #{_encoder_forward_impl.1} parent=1 // pred_region
      _
    $region41: #{_encoder_forward_impl.1} parent=1 // pred_fallthru
      _
    // Predicated region
    $region42: #{_encoder_forward_impl.1} parent=1 // pred_check
      _
    $region43: #{_encoder_forward_impl.1} parent=1 // pred_check_branch
      %50 = sbr.rel (0) target = $region45
    $region44: #{_encoder_forward_impl.1} parent=1 // pred_region
      _
    $region45: #{_encoder_forward_impl.1} parent=1 // pred_fallthru
      _
    // Predicated region
    $region46: #{_encoder_forward_impl.1} parent=1 // pred_check
      _
    $region47: #{_encoder_forward_impl.1} parent=1 // pred_check_branch
      %52 = sbr.rel (0) target = $region49
    $region48: #{_encoder_forward_impl.1} parent=1 // pred_region
      %54 = dma.done [#allocation3], 8192
    $region49: #{_encoder_forward_impl.1} parent=1 // pred_fallthru
      _
    %v55 = vld [vmem:[%s0] sm:$0xff]
    %v56 = vld [vmem:[%s0 + $0x8] sm:$0xff]
    %v57 = vld [vmem:[%s1] sm:$0xff]
    %v58 = vld [vmem:[%s1 + $0x8] sm:$0xff]
    %v59 = vld [vmem:[%s1 + $0x10] sm:$0xff]
    %v60 = vld [vmem:[%s1 + $0x18] sm:$0xff]
    %v61 = vld [vmem:[%s2] sm:$0x1]
    %v63 = vperm.slane %v61, 0
    %vm65 = vcmask 261120
    %v67 = vsel %vm65, %v55, 0
    %v70 = vsel %vm65, %v56, 0
    %72 = vmatpush.msra.mxu0 0.0
    %73 = vmatpush.msra.mxu0 0.0
    %74 = vmatpush.msra.mxu0 0.0
    %75 = vmatpush.msra.mxu0 0.0
    %76 = vmatpush.msra.mxu0 0.0
    %77 = vmatpush.msra.mxu0 0.0
    %78 = vmatpush.msra.mxu0 0.0
    %79 = vmatpush.msra.mxu0 0.0
    %80 = vmatpush.msra.mxu0 0.0
    %81 = vmatpush.msra.mxu0 0.0
    %82 = vmatpush.msra.mxu0 0.0
    %83 = vmatpush.msra.mxu0 0.0
    %84 = vmatpush.msra.mxu0 %v60
    %85 = vmatpush.msra.mxu0 %v59
    %86 = vmatpush.msra.mxu0 %v58
    %87 = vmatpush.msra.mxu0 %v57
    %88 = vmatmul.f32.gmra.mxu0 %v67
    %v89 = vpop.f32.mrf.mxu0
    %v90 = vadd.f32 %v63, %v89
    %91 = vmatmul.f32.gmra.mxu0 %v70
    %v92 = vpop.f32.mrf.mxu0
    %v93 = vadd.f32 %v63, %v92
    %94 = vdwg.mxu0
    %v95 = vmul.f32 %v90, 0.02
    %v96 = vmul.f32 %v93, 0.02
    %v97 = vmax.f32 %v90, %v95
    %v98 = vmax.f32 %v93, %v96
    %v99 = vld [vmem:[%s3] sm:$0xff]
    %v100 = vld [vmem:[%s3 + $0x8] sm:$0xff]
    %v101 = vld [vmem:[%s3 + $0x10] sm:$0xff]
    %v102 = vld [vmem:[%s3 + $0x18] sm:$0xff]
    %v103 = vld [vmem:[%s3 + $0x20] sm:$0xff]
    %v104 = vld [vmem:[%s3 + $0x28] sm:$0xff]
    %v105 = vld [vmem:[%s3 + $0x30] sm:$0xff]
    %v106 = vld [vmem:[%s3 + $0x38] sm:$0xff]
    %v107 = vld [vmem:[%s3 + $0x40] sm:$0xff]
    %v108 = vld [vmem:[%s3 + $0x48] sm:$0xff]
    %v109 = vld [vmem:[%s3 + $0x50] sm:$0xff]
    %v110 = vld [vmem:[%s3 + $0x58] sm:$0xff]
    %v111 = vld [vmem:[%s3 + $0x60] sm:$0xff]
    %v112 = vld [vmem:[%s3 + $0x68] sm:$0xff]
    %v113 = vld [vmem:[%s3 + $0x70] sm:$0xff]
    %v114 = vld [vmem:[%s3 + $0x78] sm:$0xff]
    %v115 = vld [vmem:[%s4] sm:$0x3]
    %v117 = vperm.slane %v115, 0
    %v118 = vperm.slane %v115, 1
    %vm121 = vcmask 523264
    %v123 = vsel %vm121, %v97, 0
    %v126 = vsel %vm121, %v98, 0
    %128 = vmatpush.msra.mxu0 0.0
    %129 = vmatpush.msra.mxu0 0.0
    %130 = vmatpush.msra.mxu0 0.0
    %131 = vmatpush.msra.mxu0 0.0
    %132 = vmatpush.msra.mxu0 0.0
    %133 = vmatpush.msra.mxu0 0.0
    %134 = vmatpush.msra.mxu0 0.0
    %135 = vmatpush.msra.mxu0 0.0
    %136 = vmatpush.msra.mxu0 %v113
    %137 = vmatpush.msra.mxu0 %v111
    %138 = vmatpush.msra.mxu0 %v109
    %139 = vmatpush.msra.mxu0 %v107
    %140 = vmatpush.msra.mxu0 %v105
    %141 = vmatpush.msra.mxu0 %v103
    %142 = vmatpush.msra.mxu0 %v101
    %143 = vmatpush.msra.mxu0 %v99
    %144 = vmatmul.f32.gmra.mxu0 %v123
    %v145 = vpop.f32.mrf.mxu0
    %v146 = vadd.f32 %v117, %v145
    %147 = vmatmul.f32.gmra.mxu0 %v126
    %v148 = vpop.f32.mrf.mxu0
    %v149 = vadd.f32 %v117, %v148
    %150 = vdwg.mxu0
    %151 = vmatpush.msra.mxu0 0.0
    %152 = vmatpush.msra.mxu0 0.0
    %153 = vmatpush.msra.mxu0 0.0
    %154 = vmatpush.msra.mxu0 0.0
    %155 = vmatpush.msra.mxu0 0.0
    %156 = vmatpush.msra.mxu0 0.0
    %157 = vmatpush.msra.mxu0 0.0
    %158 = vmatpush.msra.mxu0 0.0
    %159 = vmatpush.msra.mxu0 %v114
    %160 = vmatpush.msra.mxu0 %v112
    %161 = vmatpush.msra.mxu0 %v110
    %162 = vmatpush.msra.mxu0 %v108
    %163 = vmatpush.msra.mxu0 %v106
    %164 = vmatpush.msra.mxu0 %v104
    %165 = vmatpush.msra.mxu0 %v102
    %166 = vmatpush.msra.mxu0 %v100
    %167 = vmatmul.f32.gmra.mxu0 %v123
    %v168 = vpop.f32.mrf.mxu0
    %v169 = vadd.f32 %v118, %v168
    %170 = vmatmul.f32.gmra.mxu0 %v126
    %v171 = vpop.f32.mrf.mxu0
    %v172 = vadd.f32 %v118, %v171
    %173 = vdwg.mxu0
    %v174 = vmul.f32 %v146, 0.02
    %v175 = vmul.f32 %v169, 0.02
    %v176 = vmul.f32 %v149, 0.02
    %v177 = vmul.f32 %v172, 0.02
    %v178 = vmax.f32 %v146, %v174
    %v179 = vmax.f32 %v169, %v175
    %v180 = vmax.f32 %v149, %v176
    %v181 = vmax.f32 %v172, %v177
    %v182 = vld [vmem:[#allocation2] sm:$0xff]
    %v183 = vld [vmem:[#allocation2 + $0x8] sm:$0xff]
    %v184 = vld [vmem:[#allocation2 + $0x10] sm:$0xff]
    %v185 = vld [vmem:[#allocation2 + $0x18] sm:$0xff]
    %v186 = vld [vmem:[#allocation2 + $0x20] sm:$0xff]
    %v187 = vld [vmem:[#allocation2 + $0x28] sm:$0xff]
    %v188 = vld [vmem:[#allocation2 + $0x30] sm:$0xff]
    %v189 = vld [vmem:[#allocation2 + $0x38] sm:$0xff]
    %v190 = vld [vmem:[#allocation2 + $0x40] sm:$0xff]
    %v191 = vld [vmem:[#allocation2 + $0x48] sm:$0xff]
    %v192 = vld [vmem:[#allocation2 + $0x50] sm:$0xff]
    %v193 = vld [vmem:[#allocation2 + $0x58] sm:$0xff]
    %v194 = vld [vmem:[#allocation2 + $0x60] sm:$0xff]
    %v195 = vld [vmem:[#allocation2 + $0x68] sm:$0xff]
    %v196 = vld [vmem:[#allocation2 + $0x70] sm:$0xff]
    %v197 = vld [vmem:[#allocation2 + $0x78] sm:$0xff]
    %v198 = vld [vmem:[#allocation2 + $0x80] sm:$0xff]
    %v199 = vld [vmem:[#allocation2 + $0x88] sm:$0xff]
    %v200 = vld [vmem:[#allocation2 + $0x90] sm:$0xff]
    %v201 = vld [vmem:[#allocation2 + $0x98] sm:$0xff]
    %v202 = vld [vmem:[#allocation2 + $0xa0] sm:$0xff]
    %v203 = vld [vmem:[#allocation2 + $0xa8] sm:$0xff]
    %v204 = vld [vmem:[#allocation2 + $0xb0] sm:$0xff]
    %v205 = vld [vmem:[#allocation2 + $0xb8] sm:$0xff]
    %v206 = vld [vmem:[#allocation2 + $0xc0] sm:$0xff]
    %v207 = vld [vmem:[#allocation2 + $0xc8] sm:$0xff]
    %v208 = vld [vmem:[#allocation2 + $0xd0] sm:$0xff]
    %v209 = vld [vmem:[#allocation2 + $0xd8] sm:$0xff]
    %v210 = vld [vmem:[#allocation2 + $0xe0] sm:$0xff]
    %v211 = vld [vmem:[#allocation2 + $0xe8] sm:$0xff]
    %v212 = vld [vmem:[#allocation2 + $0xf0] sm:$0xff]
    %v213 = vld [vmem:[#allocation2 + $0xf8] sm:$0xff]
    %v214 = vld [vmem:[#allocation2 + $0x100] sm:$0xff]
    %v215 = vld [vmem:[#allocation2 + $0x108] sm:$0xff]
    %v216 = vld [vmem:[#allocation2 + $0x110] sm:$0xff]
    %v217 = vld [vmem:[#allocation2 + $0x118] sm:$0xff]
    %v218 = vld [vmem:[#allocation2 + $0x120] sm:$0xff]
    %v219 = vld [vmem:[#allocation2 + $0x128] sm:$0xff]
    %v220 = vld [vmem:[#allocation2 + $0x130] sm:$0xff]
    %v221 = vld [vmem:[#allocation2 + $0x138] sm:$0xff]
    %v222 = vld [vmem:[#allocation2 + $0x140] sm:$0xff]
    %v223 = vld [vmem:[#allocation2 + $0x148] sm:$0xff]
    %v224 = vld [vmem:[#allocation2 + $0x150] sm:$0xff]
    %v225 = vld [vmem:[#allocation2 + $0x158] sm:$0xff]
    %v226 = vld [vmem:[#allocation2 + $0x160] sm:$0xff]
    %v227 = vld [vmem:[#allocation2 + $0x168] sm:$0xff]
    %v228 = vld [vmem:[#allocation2 + $0x170] sm:$0xff]
    %v229 = vld [vmem:[#allocation2 + $0x178] sm:$0xff]
    %v230 = vld [vmem:[#allocation2 + $0x180] sm:$0xff]
    %v231 = vld [vmem:[#allocation2 + $0x188] sm:$0xff]
    %v232 = vld [vmem:[#allocation2 + $0x190] sm:$0xff]
    %v233 = vld [vmem:[#allocation2 + $0x198] sm:$0xff]
    %v234 = vld [vmem:[#allocation2 + $0x1a0] sm:$0xff]
    %v235 = vld [vmem:[#allocation2 + $0x1a8] sm:$0xff]
    %v236 = vld [vmem:[#allocation2 + $0x1b0] sm:$0xff]
    %v237 = vld [vmem:[#allocation2 + $0x1b8] sm:$0xff]
    %v238 = vld [vmem:[#allocation2 + $0x1c0] sm:$0xff]
    %v239 = vld [vmem:[#allocation2 + $0x1c8] sm:$0xff]
    %v240 = vld [vmem:[#allocation2 + $0x1d0] sm:$0xff]
    %v241 = vld [vmem:[#allocation2 + $0x1d8] sm:$0xff]
    %v242 = vld [vmem:[#allocation2 + $0x1e0] sm:$0xff]
    %v243 = vld [vmem:[#allocation2 + $0x1e8] sm:$0xff]
    %v244 = vld [vmem:[#allocation2 + $0x1f0] sm:$0xff]
    %v245 = vld [vmem:[#allocation2 + $0x1f8] sm:$0xff]
    %v246 = vld [vmem:[%s6] sm:$0x3]
    %v248 = vperm.slane %v246, 0
    %v249 = vperm.slane %v246, 1
    %252 = vmatpush.msra.mxu0 %v212
    %253 = vmatpush.msra.mxu0 %v210
    %254 = vmatpush.msra.mxu0 %v208
    %255 = vmatpush.msra.mxu0 %v206
    %256 = vmatpush.msra.mxu0 %v204
    %257 = vmatpush.msra.mxu0 %v202
    %258 = vmatpush.msra.mxu0 %v200
    %259 = vmatpush.msra.mxu0 %v198
    %260 = vmatpush.msra.mxu0 %v196
    %261 = vmatpush.msra.mxu0 %v194
    %262 = vmatpush.msra.mxu0 %v192
    %263 = vmatpush.msra.mxu0 %v190
    %264 = vmatpush.msra.mxu0 %v188
    %265 = vmatpush.msra.mxu0 %v186
    %266 = vmatpush.msra.mxu0 %v184
    %267 = vmatpush.msra.mxu0 %v182
    %268 = vmatmul.f32.gmra.mxu0 %v178
    %v269 = vpop.f32.mrf.mxu0
    %v270 = vadd.f32 %v248, %v269
    %271 = vmatmul.f32.gmra.mxu0 %v180
    %v272 = vpop.f32.mrf.mxu0
    %v273 = vadd.f32 %v248, %v272
    %274 = vdwg.mxu0
    %275 = vmatpush.msra.mxu0 %v244
    %276 = vmatpush.msra.mxu0 %v242
    %277 = vmatpush.msra.mxu0 %v240
    %278 = vmatpush.msra.mxu0 %v238
    %279 = vmatpush.msra.mxu0 %v236
    %280 = vmatpush.msra.mxu0 %v234
    %281 = vmatpush.msra.mxu0 %v232
    %282 = vmatpush.msra.mxu0 %v230
    %283 = vmatpush.msra.mxu0 %v228
    %284 = vmatpush.msra.mxu0 %v226
    %285 = vmatpush.msra.mxu0 %v224
    %286 = vmatpush.msra.mxu0 %v222
    %287 = vmatpush.msra.mxu0 %v220
    %288 = vmatpush.msra.mxu0 %v218
    %289 = vmatpush.msra.mxu0 %v216
    %290 = vmatpush.msra.mxu0 %v214
    %291 = vmatmul.f32.gmra.mxu0 %v179
    %v292 = vpop.f32.mrf.mxu0
    %v293 = vadd.f32 %v270, %v292
    %294 = vmatmul.f32.gmra.mxu0 %v181
    %v295 = vpop.f32.mrf.mxu0
    %v296 = vadd.f32 %v273, %v295
    %297 = vdwg.mxu0
    %298 = vmatpush.msra.mxu0 %v213
    %299 = vmatpush.msra.mxu0 %v211
    %300 = vmatpush.msra.mxu0 %v209
    %301 = vmatpush.msra.mxu0 %v207
    %302 = vmatpush.msra.mxu0 %v205
    %303 = vmatpush.msra.mxu0 %v203
    %304 = vmatpush.msra.mxu0 %v201
    %305 = vmatpush.msra.mxu0 %v199
    %306 = vmatpush.msra.mxu0 %v197
    %307 = vmatpush.msra.mxu0 %v195
    %308 = vmatpush.msra.mxu0 %v193
    %309 = vmatpush.msra.mxu0 %v191
    %310 = vmatpush.msra.mxu0 %v189
    %311 = vmatpush.msra.mxu0 %v187
    %312 = vmatpush.msra.mxu0 %v185
    %313 = vmatpush.msra.mxu0 %v183
    %314 = vmatmul.f32.gmra.mxu0 %v178
    %v315 = vpop.f32.mrf.mxu0
    %v316 = vadd.f32 %v249, %v315
    %317 = vmatmul.f32.gmra.mxu0 %v180
    %v318 = vpop.f32.mrf.mxu0
    %v319 = vadd.f32 %v249, %v318
    %320 = vdwg.mxu0
    %321 = vmatpush.msra.mxu0 %v245
    %322 = vmatpush.msra.mxu0 %v243
    %323 = vmatpush.msra.mxu0 %v241
    %324 = vmatpush.msra.mxu0 %v239
    %325 = vmatpush.msra.mxu0 %v237
    %326 = vmatpush.msra.mxu0 %v235
    %327 = vmatpush.msra.mxu0 %v233
    %328 = vmatpush.msra.mxu0 %v231
    %329 = vmatpush.msra.mxu0 %v229
    %330 = vmatpush.msra.mxu0 %v227
    %331 = vmatpush.msra.mxu0 %v225
    %332 = vmatpush.msra.mxu0 %v223
    %333 = vmatpush.msra.mxu0 %v221
    %334 = vmatpush.msra.mxu0 %v219
    %335 = vmatpush.msra.mxu0 %v217
    %336 = vmatpush.msra.mxu0 %v215
    %337 = vmatmul.f32.gmra.mxu0 %v179
    %v338 = vpop.f32.mrf.mxu0
    %v339 = vadd.f32 %v316, %v338
    %340 = vmatmul.f32.gmra.mxu0 %v181
    %v341 = vpop.f32.mrf.mxu0
    %v342 = vadd.f32 %v319, %v341
    %343 = vdwg.mxu0
    %v344 = vmul.f32 %v293, 0.02
    %v345 = vmul.f32 %v339, 0.02
    %v346 = vmul.f32 %v296, 0.02
    %v347 = vmul.f32 %v342, 0.02
    %v348 = vmax.f32 %v293, %v344
    %v349 = vmax.f32 %v339, %v345
    %v350 = vmax.f32 %v296, %v346
    %v351 = vmax.f32 %v342, %v347
    %v352 = vld [vmem:[%s7] sm:$0xff]
    %v353 = vld [vmem:[%s7 + $0x8] sm:$0xff]
    %v354 = vld [vmem:[%s7 + $0x10] sm:$0xff]
    %v355 = vld [vmem:[%s7 + $0x18] sm:$0xff]
    %v356 = vld [vmem:[%s7 + $0x20] sm:$0xff]
    %v357 = vld [vmem:[%s7 + $0x28] sm:$0xff]
    %v358 = vld [vmem:[%s7 + $0x30] sm:$0xff]
    %v359 = vld [vmem:[%s7 + $0x38] sm:$0xff]
    %v360 = vld [vmem:[%s7 + $0x40] sm:$0xff]
    %v361 = vld [vmem:[%s7 + $0x48] sm:$0xff]
    %v362 = vld [vmem:[%s7 + $0x50] sm:$0xff]
    %v363 = vld [vmem:[%s7 + $0x58] sm:$0xff]
    %v364 = vld [vmem:[%s7 + $0x60] sm:$0xff]
    %v365 = vld [vmem:[%s7 + $0x68] sm:$0xff]
    %v366 = vld [vmem:[%s7 + $0x70] sm:$0xff]
    %v367 = vld [vmem:[%s7 + $0x78] sm:$0xff]
    %v368 = vld [vmem:[%s7 + $0x80] sm:$0xff]
    %v369 = vld [vmem:[%s7 + $0x88] sm:$0xff]
    %v370 = vld [vmem:[%s7 + $0x90] sm:$0xff]
    %v371 = vld [vmem:[%s7 + $0x98] sm:$0xff]
    %v372 = vld [vmem:[%s7 + $0xa0] sm:$0xff]
    %v373 = vld [vmem:[%s7 + $0xa8] sm:$0xff]
    %v374 = vld [vmem:[%s7 + $0xb0] sm:$0xff]
    %v375 = vld [vmem:[%s7 + $0xb8] sm:$0xff]
    %v376 = vld [vmem:[%s7 + $0xc0] sm:$0xff]
    %v377 = vld [vmem:[%s7 + $0xc8] sm:$0xff]
    %v378 = vld [vmem:[%s7 + $0xd0] sm:$0xff]
    %v379 = vld [vmem:[%s7 + $0xd8] sm:$0xff]
    %v380 = vld [vmem:[%s7 + $0xe0] sm:$0xff]
    %v381 = vld [vmem:[%s7 + $0xe8] sm:$0xff]
    %v382 = vld [vmem:[%s7 + $0xf0] sm:$0xff]
    %v383 = vld [vmem:[%s7 + $0xf8] sm:$0xff]
    %v384 = vld [vmem:[%s8] sm:$0x1]
    %v386 = vperm.slane %v384, 0
    %388 = vmatpush.msra.mxu0 %v367
    %389 = vmatpush.msra.mxu0 %v366
    %390 = vmatpush.msra.mxu0 %v365
    %391 = vmatpush.msra.mxu0 %v364
    %392 = vmatpush.msra.mxu0 %v363
    %393 = vmatpush.msra.mxu0 %v362
    %394 = vmatpush.msra.mxu0 %v361
    %395 = vmatpush.msra.mxu0 %v360
    %396 = vmatpush.msra.mxu0 %v359
    %397 = vmatpush.msra.mxu0 %v358
    %398 = vmatpush.msra.mxu0 %v357
    %399 = vmatpush.msra.mxu0 %v356
    %400 = vmatpush.msra.mxu0 %v355
    %401 = vmatpush.msra.mxu0 %v354
    %402 = vmatpush.msra.mxu0 %v353
    %403 = vmatpush.msra.mxu0 %v352
    %404 = vmatmul.f32.gmra.mxu0 %v348
    %v405 = vpop.f32.mrf.mxu0
    %v406 = vadd.f32 %v386, %v405
    %407 = vmatmul.f32.gmra.mxu0 %v350
    %v408 = vpop.f32.mrf.mxu0
    %v409 = vadd.f32 %v386, %v408
    %410 = vdwg.mxu0
    %411 = vmatpush.msra.mxu0 %v383
    %412 = vmatpush.msra.mxu0 %v382
    %413 = vmatpush.msra.mxu0 %v381
    %414 = vmatpush.msra.mxu0 %v380
    %415 = vmatpush.msra.mxu0 %v379
    %416 = vmatpush.msra.mxu0 %v378
    %417 = vmatpush.msra.mxu0 %v377
    %418 = vmatpush.msra.mxu0 %v376
    %419 = vmatpush.msra.mxu0 %v375
    %420 = vmatpush.msra.mxu0 %v374
    %421 = vmatpush.msra.mxu0 %v373
    %422 = vmatpush.msra.mxu0 %v372
    %423 = vmatpush.msra.mxu0 %v371
    %424 = vmatpush.msra.mxu0 %v370
    %425 = vmatpush.msra.mxu0 %v369
    %426 = vmatpush.msra.mxu0 %v368
    %427 = vmatmul.f32.gmra.mxu0 %v349
    %v428 = vpop.f32.mrf.mxu0
    %v429 = vadd.f32 %v406, %v428
    %430 = vmatmul.f32.gmra.mxu0 %v351
    %v431 = vpop.f32.mrf.mxu0
    %v432 = vadd.f32 %v409, %v431
    %433 = vdwg.mxu0
    %v434 = vmul.f32 %v429, 0.02
    %v435 = vmul.f32 %v432, 0.02
    %v436 = vmax.f32 %v429, %v434
    %v437 = vmax.f32 %v432, %v435
    %v438 = vld [vmem:[%s9] sm:$0xff]
    %v439 = vld [vmem:[%s9 + $0x8] sm:$0xff]
    %v440 = vld [vmem:[%s9 + $0x10] sm:$0xff]
    %v441 = vld [vmem:[%s9 + $0x18] sm:$0xff]
    %v442 = vld [vmem:[%s9 + $0x20] sm:$0xff]
    %v443 = vld [vmem:[%s9 + $0x28] sm:$0xff]
    %v444 = vld [vmem:[%s9 + $0x30] sm:$0xff]
    %v445 = vld [vmem:[%s9 + $0x38] sm:$0xff]
    %v446 = vld [vmem:[%s10] sm:$0x1]
    %v448 = vperm.slane %v446, 0
    %v451 = vsel %vm121, %v436, 0
    %v454 = vsel %vm121, %v437, 0
    %456 = vmatpush.msra.mxu0 0.0
    %457 = vmatpush.msra.mxu0 0.0
    %458 = vmatpush.msra.mxu0 0.0
    %459 = vmatpush.msra.mxu0 0.0
    %460 = vmatpush.msra.mxu0 0.0
    %461 = vmatpush.msra.mxu0 0.0
    %462 = vmatpush.msra.mxu0 0.0
    %463 = vmatpush.msra.mxu0 0.0
    %464 = vmatpush.msra.mxu0 %v445
    %465 = vmatpush.msra.mxu0 %v444
    %466 = vmatpush.msra.mxu0 %v443
    %467 = vmatpush.msra.mxu0 %v442
    %468 = vmatpush.msra.mxu0 %v441
    %469 = vmatpush.msra.mxu0 %v440
    %470 = vmatpush.msra.mxu0 %v439
    %471 = vmatpush.msra.mxu0 %v438
    %472 = vmatmul.f32.gmra.mxu0 %v451
    %v473 = vpop.f32.mrf.mxu0
    %v474 = vadd.f32 %v448, %v473
    %475 = vmatmul.f32.gmra.mxu0 %v454
    %v476 = vpop.f32.mrf.mxu0
    %v477 = vadd.f32 %v448, %v476
    %478 = vdwg.mxu0
    %v479 = vtanh.pop %v474
    %v480 = vtanh.pop %v477
    %481 = vst.msk [vmem:[#allocation5] sm:$0xff] %vm65, %v479
    %482 = vst.msk [vmem:[#allocation5 + $0x8] sm:$0xff] %vm65, %v480
    // Predicated region
    $region50: #{_encoder_forward_impl.1} parent=1 // pred_check
      _
    $region51: #{_encoder_forward_impl.1} parent=1 // pred_check_branch
      %484 = sbr.rel (0) target = $region53
    $region52: #{_encoder_forward_impl.1} parent=1 // pred_region
      %486 = vsyncadd [#allocation4], 0
      %s487 = sshll.u32 [#allocation5], 4
      %s488 = int_to_ptr.vmem [resolvable:$true] %s487
      %s489 = sshll.u32 %s11, 4
      %s490 = int_to_ptr.hbm [resolvable:$true] %s489
      %495 = dma.vmem_to_hbm [thread:$0]  %s488, 256, %s490, [#allocation4], 128, 128, 8
    $region53: #{_encoder_forward_impl.1} parent=1 // pred_fallthru
      _
    // Predicated region
    $region54: #{_encoder_forward_impl.1} parent=1 // pred_check
      _
    $region55: #{_encoder_forward_impl.1} parent=1 // pred_check_branch
      %497 = sbr.rel (0) target = $region57
    $region56: #{_encoder_forward_impl.1} parent=1 // pred_region
      %499 = dma.done [#allocation4], 256
    $region57: #{_encoder_forward_impl.1} parent=1 // pred_fallthru
      _
    %500 = vsyncpa [#allocation3], 1
    %501 = vsyncpa [#allocation4], 1

</llo_original>
